<compile_context>
chip_gen: v6e
topology: v6e:2x2x1
jax: 0.10.0
libtpu: 0.0.40
codegen_flags: <defaults>
</compile_context>

<pallas_src>
import functools
import numpy as np
import jax
import jax.numpy as jnp
from jax.experimental import pallas as pl
from jax.experimental.pallas import tpu as pltpu


_TARGET_BLOCK_BYTES = 1 << 20  # ~1 MiB per input block


def _largest_divisor(n, cap, align=1):
    """Largest d | n with d <= cap and (d % align == 0 or d == n); None if no such d."""
    best = None
    for d in range(1, n + 1):
        if n % d == 0 and d <= cap and (d % align == 0 or d == n):
            best = d
    return best


def _choose_tiles(N, rows):
    bytes_per_row = 128 * 4
    sample_bytes = rows * bytes_per_row
    if sample_bytes <= _TARGET_BLOCK_BYTES:
        # Whole samples fit comfortably: batch several samples per grid step.
        tr = rows
        max_tb = max(1, _TARGET_BLOCK_BYTES // sample_bytes)
        tb = _largest_divisor(N, max_tb) or 1
    else:
        # Sample too large for one block: tile the row (reduction) axis instead,
        # keeping the working set bounded regardless of C*H*W.
        tb = 1
        max_tr = max(8, _TARGET_BLOCK_BYTES // bytes_per_row)
        tr = _largest_divisor(rows, max_tr, align=8) or rows
    return tb, tr


def _bce_loss_kernel(pred_ref, tgt_ref, num_ref, den_ref,
                     sum_t_ref, sum_bce_ref, sum_bcet_ref, *, elems_per_sample):
    r = pl.program_id(1)

    @pl.when(r == 0)
    def _():
        sum_t_ref[...] = jnp.zeros_like(sum_t_ref)
        sum_bce_ref[...] = jnp.zeros_like(sum_bce_ref)
        sum_bcet_ref[...] = jnp.zeros_like(sum_bcet_ref)

    x = pred_ref[...].astype(jnp.float32)   # (TB, TR, 128)
    t = tgt_ref[...].astype(jnp.float32)

    # numerically-stable BCE with logits (reduction='none')
    bce = jnp.maximum(x, 0.0) - x * t + jnp.log1p(jnp.exp(-jnp.abs(x)))

    # Per-sample, per-lane partials: only the row/sublane axis is collapsed per step.
    sum_t_ref[...] += jnp.sum(t, axis=1)
    sum_bce_ref[...] += jnp.sum(bce, axis=1)
    sum_bcet_ref[...] += jnp.sum(bce * t, axis=1)

    @pl.when(r == pl.num_programs(1) - 1)
    def _():
        sum_t_lane = sum_t_ref[...]                            # (TB, 128)
        sum_t = jnp.sum(sum_t_lane, axis=1, keepdims=True)     # (TB, 1)
        scale = sum_t * jnp.float32(1.0 / elems_per_sample)    # (TB, 1)
        # adaptive weight w = 1 + scale_i * t, eliminated algebraically:
        #   num_i = sum(bce_i) + scale_i * sum(bce_i * t_i)
        #   den_i = F          + scale_i * sum(t_i)   (F spread evenly over 128 lanes)
        num_ref[0] = sum_bce_ref[...] + scale * sum_bcet_ref[...]
        den_ref[0] = jnp.float32(elems_per_sample / 128.0) + scale * sum_t_lane


def my_bce_loss(pred, target):
    """Pallas implementation of MyBCELoss.forward. pred/target: NCHW float arrays."""
    assert pred.shape == target.shape
    N = pred.shape[0]
    F = int(np.prod(pred.shape[1:]))
    assert F % 128 == 0, "per-sample element count must be a multiple of 128 for this kernel"
    rows = F // 128

    tb, tr = _choose_tiles(N, rows)
    nb = N // tb
    nr = rows // tr

    p3 = pred.reshape(N, rows, 128)
    t3 = target.reshape(N, rows, 128)

    kernel = functools.partial(_bce_loss_kernel, elems_per_sample=F)

    num, den = pl.pallas_call(
        kernel,
        out_shape=(
            jax.ShapeDtypeStruct((nb, tb, 128), jnp.float32),
            jax.ShapeDtypeStruct((nb, tb, 128), jnp.float32),
        ),
        grid_spec=pltpu.PrefetchScalarGridSpec(
            num_scalar_prefetch=0,
            grid=(nb, nr),
            in_specs=[
                pl.BlockSpec((tb, tr, 128), lambda b, r: (b, r, 0)),
                pl.BlockSpec((tb, tr, 128), lambda b, r: (b, r, 0)),
            ],
            out_specs=[
                pl.BlockSpec((1, tb, 128), lambda b, r: (b, 0, 0)),
                pl.BlockSpec((1, tb, 128), lambda b, r: (b, 0, 0)),
            ],
            scratch_shapes=[
                pltpu.VMEM((tb, 128), jnp.float32),
                pltpu.VMEM((tb, 128), jnp.float32),
                pltpu.VMEM((tb, 128), jnp.float32),
            ],
        ),
        compiler_params=pltpu.CompilerParams(
            dimension_semantics=("parallel", "arbitrary"),
        ),
    )(p3, t3)

    # Tiny final reduction + division in plain JAX over lane-dense per-block partials.
    return jnp.sum(num) / jnp.sum(den)


def _reference(pred, target):
    # pure-JAX reference mirroring the PyTorch module
    F = float(np.prod(pred.shape[1:]))
    dims = tuple(range(1, pred.ndim))
    scale = jnp.sum(target, axis=dims) / F                       # (N,)
    w = 1.0 + scale.reshape((-1,) + (1,) * (pred.ndim - 1)) * target
    bce = jnp.maximum(pred, 0.0) - pred * target + jnp.log1p(jnp.exp(-jnp.abs(pred)))
    return jnp.sum(bce * w) / jnp.sum(w)


if __name__ == "__main__":
    key = jax.random.PRNGKey(0)
    k1, k2 = jax.random.split(key)
    N, C, H, W = 2, 4, 16, 16
    pred = jax.random.normal(k1, (N, C, H, W), dtype=jnp.float32)
    target = (jax.random.uniform(k2, (N, C, H, W)) > 0.7).astype(jnp.float32)

    loss = my_bce_loss(pred, target)
    jax.block_until_ready(loss)

    ref = _reference(pred, target)
    assert jnp.allclose(loss, ref, rtol=1e-5, atol=1e-5), (loss, ref)
    print("KERNEL_OK")
</pallas_src>

<mosaic_0001>
module attributes {stable_mosaic.version = 11 : i64} {
  func.func @_bce_loss_kernel(%arg0: i32, %arg1: i32, %arg2: memref<2x8x128xf32, #tpu.memory_space<vmem>>, %arg3: memref<2x8x128xf32, #tpu.memory_space<vmem>>, %arg4: memref<1x2x128xf32, #tpu.memory_space<vmem>>, %arg5: memref<1x2x128xf32, #tpu.memory_space<vmem>>, %arg6: memref<2x128xf32, #tpu.memory_space<vmem>>, %arg7: memref<2x128xf32, #tpu.memory_space<vmem>>, %arg8: memref<2x128xf32, #tpu.memory_space<vmem>>) attributes {dimension_semantics = [#tpu.dimension_semantics<parallel>, #tpu.dimension_semantics<arbitrary>], iteration_bounds = array<i64: 1, 1>, scalar_prefetch = 0 : i64, scratch_operands = 3 : i64, tpu.core_type = #tpu.core_type<tc>, window_params = [{transform_indices = @transform_0, window_bounds = array<i64: 2, 8, 128>}, {transform_indices = @transform_1, window_bounds = array<i64: 2, 8, 128>}, {transform_indices = @transform_2, window_bounds = array<i64: 1, 2, 128>}, {transform_indices = @transform_3, window_bounds = array<i64: 1, 2, 128>}]} {
    %c0_i32 = arith.constant 0 : i32
    %0 = arith.cmpi eq, %arg1, %c0_i32 : i32
    %1 = arith.extui %0 : i1 to i32
    %c0_i32_0 = arith.constant 0 : i32
    %2 = arith.cmpi ne, %1, %c0_i32_0 : i32
    scf.if %2 {
      %cst_24 = arith.constant 0.000000e+00 : f32
      %31 = vector.broadcast %cst_24 : f32 to vector<2x128xf32>
      %c0_25 = arith.constant 0 : index
      %c0_26 = arith.constant 0 : index
      %32 = vector.load %arg6[%c0_25, %c0_26] : memref<2x128xf32, #tpu.memory_space<vmem>>, vector<2x128xf32>
      tpu.vector_store %arg6[%c0_25, %c0_26], %31 {strides = array<i32>} : memref<2x128xf32, #tpu.memory_space<vmem>>, vector<2x128xf32>,
      %cst_27 = arith.constant 0.000000e+00 : f32
      %33 = vector.broadcast %cst_27 : f32 to vector<2x128xf32>
      %c0_28 = arith.constant 0 : index
      %c0_29 = arith.constant 0 : index
      %34 = vector.load %arg7[%c0_28, %c0_29] : memref<2x128xf32, #tpu.memory_space<vmem>>, vector<2x128xf32>
      tpu.vector_store %arg7[%c0_28, %c0_29], %33 {strides = array<i32>} : memref<2x128xf32, #tpu.memory_space<vmem>>, vector<2x128xf32>,
      %cst_30 = arith.constant 0.000000e+00 : f32
      %35 = vector.broadcast %cst_30 : f32 to vector<2x128xf32>
      %c0_31 = arith.constant 0 : index
      %c0_32 = arith.constant 0 : index
      %36 = vector.load %arg8[%c0_31, %c0_32] : memref<2x128xf32, #tpu.memory_space<vmem>>, vector<2x128xf32>
      tpu.vector_store %arg8[%c0_31, %c0_32], %35 {strides = array<i32>} : memref<2x128xf32, #tpu.memory_space<vmem>>, vector<2x128xf32>,
    } else {
    }
    %c0 = arith.constant 0 : index
    %c0_1 = arith.constant 0 : index
    %c0_2 = arith.constant 0 : index
    %3 = vector.load %arg2[%c0, %c0_1, %c0_2] : memref<2x8x128xf32, #tpu.memory_space<vmem>>, vector<2x8x128xf32>
    %c0_3 = arith.constant 0 : index
    %c0_4 = arith.constant 0 : index
    %c0_5 = arith.constant 0 : index
    %4 = vector.load %arg3[%c0_3, %c0_4, %c0_5] : memref<2x8x128xf32, #tpu.memory_space<vmem>>, vector<2x8x128xf32>
    %cst = arith.constant 0.000000e+00 : f32
    %5 = vector.broadcast %cst : f32 to vector<2x8x128xf32>
    %6 = arith.maximumf %3, %5 : vector<2x8x128xf32>
    %7 = arith.mulf %3, %4 : vector<2x8x128xf32>
    %8 = arith.subf %6, %7 : vector<2x8x128xf32>
    %9 = math.absf %3 : vector<2x8x128xf32>
    %cst_6 = arith.constant 0.000000e+00 : f32
    %10 = vector.broadcast %cst_6 : f32 to vector<2x8x128xf32>
    %11 = arith.subf %10, %9 : vector<2x8x128xf32>
    %12 = math.exp %11 : vector<2x8x128xf32>
    %13 = math.log1p %12 : vector<2x8x128xf32>
    %14 = arith.addf %8, %13 : vector<2x8x128xf32>
    %c0_7 = arith.constant 0 : index
    %c0_8 = arith.constant 0 : index
    %15 = vector.load %arg6[%c0_7, %c0_8] : memref<2x128xf32, #tpu.memory_space<vmem>>, vector<2x128xf32>
    %cst_9 = arith.constant dense<0.000000e+00> : vector<2x128xf32>
    %16 = vector.multi_reduction <add>, %4, %cst_9 [1] : vector<2x8x128xf32> to vector<2x128xf32>
    %17 = arith.addf %15, %16 : vector<2x128xf32>
    %c0_10 = arith.constant 0 : index
    %c0_11 = arith.constant 0 : index
    %18 = vector.load %arg6[%c0_10, %c0_11] : memref<2x128xf32, #tpu.memory_space<vmem>>, vector<2x128xf32>
    tpu.vector_store %arg6[%c0_10, %c0_11], %17 {strides = array<i32>} : memref<2x128xf32, #tpu.memory_space<vmem>>, vector<2x128xf32>,
    %c0_12 = arith.constant 0 : index
    %c0_13 = arith.constant 0 : index
    %19 = vector.load %arg7[%c0_12, %c0_13] : memref<2x128xf32, #tpu.memory_space<vmem>>, vector<2x128xf32>
    %cst_14 = arith.constant dense<0.000000e+00> : vector<2x128xf32>
    %20 = vector.multi_reduction <add>, %14, %cst_14 [1] : vector<2x8x128xf32> to vector<2x128xf32>
    %21 = arith.addf %19, %20 : vector<2x128xf32>
    %c0_15 = arith.constant 0 : index
    %c0_16 = arith.constant 0 : index
    %22 = vector.load %arg7[%c0_15, %c0_16] : memref<2x128xf32, #tpu.memory_space<vmem>>, vector<2x128xf32>
    tpu.vector_store %arg7[%c0_15, %c0_16], %21 {strides = array<i32>} : memref<2x128xf32, #tpu.memory_space<vmem>>, vector<2x128xf32>,
    %c0_17 = arith.constant 0 : index
    %c0_18 = arith.constant 0 : index
    %23 = vector.load %arg8[%c0_17, %c0_18] : memref<2x128xf32, #tpu.memory_space<vmem>>, vector<2x128xf32>
    %24 = arith.mulf %14, %4 : vector<2x8x128xf32>
    %cst_19 = arith.constant dense<0.000000e+00> : vector<2x128xf32>
    %25 = vector.multi_reduction <add>, %24, %cst_19 [1] : vector<2x8x128xf32> to vector<2x128xf32>
    %26 = arith.addf %23, %25 : vector<2x128xf32>
    %c0_20 = arith.constant 0 : index
    %c0_21 = arith.constant 0 : index
    %27 = vector.load %arg8[%c0_20, %c0_21] : memref<2x128xf32, #tpu.memory_space<vmem>>, vector<2x128xf32>
    tpu.vector_store %arg8[%c0_20, %c0_21], %26 {strides = array<i32>} : memref<2x128xf32, #tpu.memory_space<vmem>>, vector<2x128xf32>,
    %c0_i32_22 = arith.constant 0 : i32
    %28 = arith.cmpi eq, %arg1, %c0_i32_22 : i32
    %29 = arith.extui %28 : i1 to i32
    %c0_i32_23 = arith.constant 0 : i32
    %30 = arith.cmpi ne, %29, %c0_i32_23 : i32
    scf.if %30 {
      %c0_24 = arith.constant 0 : index
      %c0_25 = arith.constant 0 : index
      %31 = vector.load %arg6[%c0_24, %c0_25] : memref<2x128xf32, #tpu.memory_space<vmem>>, vector<2x128xf32>
      %cst_26 = arith.constant dense<0.000000e+00> : vector<2xf32>
      %32 = vector.multi_reduction <add>, %31, %cst_26 [1] : vector<2x128xf32> to vector<2xf32>
      %33 = vector.shape_cast %32 : vector<2xf32> to vector<2x1xf32>
      %cst_27 = arith.constant 9.765625E-4 : f32
      %34 = vector.broadcast %cst_27 : f32 to vector<2x1xf32>
      %35 = arith.mulf %33, %34 : vector<2x1xf32>
      %c0_28 = arith.constant 0 : index
      %c0_29 = arith.constant 0 : index
      %36 = vector.load %arg7[%c0_28, %c0_29] : memref<2x128xf32, #tpu.memory_space<vmem>>, vector<2x128xf32>
      %c0_30 = arith.constant 0 : index
      %c0_31 = arith.constant 0 : index
      %37 = vector.load %arg8[%c0_30, %c0_31] : memref<2x128xf32, #tpu.memory_space<vmem>>, vector<2x128xf32>
      %38 = vector.broadcast %35 : vector<2x1xf32> to vector<2x128xf32>
      %39 = arith.mulf %38, %37 : vector<2x128xf32>
      %40 = arith.addf %36, %39 : vector<2x128xf32>
      %c0_32 = arith.constant 0 : index
      %c0_33 = arith.constant 0 : index
      %c0_34 = arith.constant 0 : index
      %41 = vector.load %arg4[%c0_32, %c0_33, %c0_34] : memref<1x2x128xf32, #tpu.memory_space<vmem>>, vector<1x2x128xf32>
      %42 = vector.shape_cast %41 : vector<1x2x128xf32> to vector<2x128xf32>
      %43 = vector.shape_cast %40 : vector<2x128xf32> to vector<1x2x128xf32>
      tpu.vector_store %arg4[%c0_32, %c0_33, %c0_34], %43 {strides = array<i32>} : memref<1x2x128xf32, #tpu.memory_space<vmem>>, vector<1x2x128xf32>,
      %44 = vector.broadcast %35 : vector<2x1xf32> to vector<2x128xf32>
      %45 = arith.mulf %44, %31 : vector<2x128xf32>
      %cst_35 = arith.constant 8.000000e+00 : f32
      %46 = vector.broadcast %cst_35 : f32 to vector<2x128xf32>
      %47 = arith.addf %46, %45 : vector<2x128xf32>
      %c0_36 = arith.constant 0 : index
      %c0_37 = arith.constant 0 : index
      %c0_38 = arith.constant 0 : index
      %48 = vector.load %arg5[%c0_36, %c0_37, %c0_38] : memref<1x2x128xf32, #tpu.memory_space<vmem>>, vector<1x2x128xf32>
      %49 = vector.shape_cast %48 : vector<1x2x128xf32> to vector<2x128xf32>
      %50 = vector.shape_cast %47 : vector<2x128xf32> to vector<1x2x128xf32>
      tpu.vector_store %arg5[%c0_36, %c0_37, %c0_38], %50 {strides = array<i32>} : memref<1x2x128xf32, #tpu.memory_space<vmem>>, vector<1x2x128xf32>,
    } else {
    }
    return
  }
  func.func @transform_0(%arg0: i32, %arg1: i32) -> (i32, i32, i32) {
    %c0_i32 = arith.constant 0 : i32
    %c0_i32_0 = arith.constant 0 : i32
    return %arg0, %arg1, %c0_i32 : i32, i32, i32
  }
  func.func @transform_1(%arg0: i32, %arg1: i32) -> (i32, i32, i32) {
    %c0_i32 = arith.constant 0 : i32
    %c0_i32_0 = arith.constant 0 : i32
    return %arg0, %arg1, %c0_i32 : i32, i32, i32
  }
  func.func @transform_2(%arg0: i32, %arg1: i32) -> (i32, i32, i32) {
    %c0_i32 = arith.constant 0 : i32
    %c0_i32_0 = arith.constant 0 : i32
    %c0_i32_1 = arith.constant 0 : i32
    return %arg0, %c0_i32, %c0_i32_0 : i32, i32, i32
  }
  func.func @transform_3(%arg0: i32, %arg1: i32) -> (i32, i32, i32) {
    %c0_i32 = arith.constant 0 : i32
    %c0_i32_0 = arith.constant 0 : i32
    %c0_i32_1 = arith.constant 0 : i32
    return %arg0, %c0_i32, %c0_i32_0 : i32, i32, i32
  }
}

</mosaic_0001>

<llo_original>
// kernel: tpu_custom_call.1
$region0: #{tpu_custom_call.1}
  #allocation0 [shape = 'u32[]', space=smem, size = 0x4, offset = 0x4, fixed_abs, tag = 'smem constant byte address 0x4 - core index']
  #allocation1 [shape = 'u32[144,128]{1,0:T(1,128)}', space=vmem, size = 0x12000, scoped, tag = 'internal scratch']
  #allocation2 [shape = 'f32[2,128]{1,0:T(2,128)}', space=vmem, size = 0x400, scoped, tag = 'scratch operand']
  #allocation3 [shape = 'f32[2,128]{1,0:T(2,128)}', space=vmem, size = 0x400, scoped, tag = 'scratch operand']
  #allocation4 [shape = 'f32[2,128]{1,0:T(2,128)}', space=vmem, size = 0x400, scoped, tag = 'scratch operand']
  %s0 = inlined_call_operand.hbm [shape: f32[2,8,128], index: 0, kind: input, shape index: {}]
  %s1 = inlined_call_operand.hbm [shape: f32[2,8,128], index: 1, kind: input, shape index: {}]
  %s2 = inlined_call_operand.hbm [shape: f32[1,2,128], index: 2, kind: output, shape index: {0}]
  %s3 = inlined_call_operand.hbm [shape: f32[1,2,128], index: 3, kind: output, shape index: {1}]
  %4 = xla_tuple %s2, %s3
  %s5 = sld [smem:[#allocation0]]
  $region42: #{tpu_custom_call.1} parent=0
    _
  %s7 = ssub.s32 1, %s5
  %s8 = scalar_select 0, %s7, %s5
  $region1: #{tpu_custom_call.1} parent=0
    #allocation5 [shape = 'u8[8192]{0}', space=vmem, size = 0x2000, scoped, tag = 'input window, operand 0, single buffered']
    #allocation6 [shape = 's32[1]{0}', space=sflag, size = 0x4, scoped, tag = 'scoped memory for tpu_custom_call.1']
    #allocation7 [shape = 's32[1]{0}', space=sflag, size = 0x4, scoped, tag = 'scoped memory for tpu_custom_call.1']
    #allocation8 [shape = 'u8[8192]{0}', space=vmem, size = 0x2000, scoped, tag = 'input window, operand 1, single buffered']
    #allocation9 [shape = 's32[1]{0}', space=sflag, size = 0x4, scoped, tag = 'scoped memory for tpu_custom_call.1']
    #allocation10 [shape = 'u8[1024]{0}', space=vmem, size = 0x400, scoped, tag = 'output window, operand 0, single buffered']
    #allocation11 [shape = 'u8[1024]{0}', space=vmem, size = 0x400, scoped, tag = 'output window, operand 1, single buffered']
    #allocation12 [shape = 's32[1]{0}', space=sflag, size = 0x4, scoped, tag = 'scoped memory for tpu_custom_call.1']
    %9 = vsyncpa [#allocation6], 0
    %10 = vsyncpa [#allocation9], 0
    %11 = vsyncpa [#allocation7], 0
    %12 = vsyncpa [#allocation12], 0
    // Predicated region
    $region2: #{tpu_custom_call.1} parent=1 // pred_check
      _
    $region3: #{tpu_custom_call.1} parent=1 // pred_check_branch
      %14 = sbr.rel (0) target = $region5
    $region4: #{tpu_custom_call.1} parent=1 // pred_region
      %s16 = ssub.s32 256, 256
      %17 = vsyncadd [#allocation6], %s16
      %s18 = sshll.u32 [#allocation5], 4
      %s19 = int_to_ptr.vmem [resolvable:$true] %s18
      %24 = dma.hbm_to_vmem [thread:$0]  %s0, 256, %s19, [#allocation6], 128, 128, 8
    $region5: #{tpu_custom_call.1} parent=1 // pred_fallthru
      _
    // Predicated region
    $region6: #{tpu_custom_call.1} parent=1 // pred_check
      _
    $region7: #{tpu_custom_call.1} parent=1 // pred_check_branch
      %26 = sbr.rel (0) target = $region9
    $region8: #{tpu_custom_call.1} parent=1 // pred_region
      %s28 = ssub.s32 256, 256
      %29 = vsyncadd [#allocation9], %s28
      %s30 = sshll.u32 [#allocation8], 4
      %s31 = int_to_ptr.vmem [resolvable:$true] %s30
      %36 = dma.hbm_to_vmem [thread:$0]  %s1, 256, %s31, [#allocation9], 128, 128, 8
    $region9: #{tpu_custom_call.1} parent=1 // pred_fallthru
      _
    // Predicated region
    $region10: #{tpu_custom_call.1} parent=1 // pred_check
      _
    $region11: #{tpu_custom_call.1} parent=1 // pred_check_branch
      %38 = sbr.rel (0) target = $region13
    $region12: #{tpu_custom_call.1} parent=1 // pred_region
      %39 = dma.done [#allocation6], 256
    $region13: #{tpu_custom_call.1} parent=1 // pred_fallthru
      _
    // Predicated region
    $region14: #{tpu_custom_call.1} parent=1 // pred_check
      _
    $region15: #{tpu_custom_call.1} parent=1 // pred_check_branch
      %41 = sbr.rel (0) target = $region17
    $region16: #{tpu_custom_call.1} parent=1 // pred_region
      %42 = dma.done [#allocation9], 256
    $region17: #{tpu_custom_call.1} parent=1 // pred_fallthru
      _
    %p43 = scmp.eq.s32.totalorder 0, 0
    // Predicated region
    $region18: #{tpu_custom_call.1} parent=1 // pred_check
      %p44 = pneg %p43
    $region19: #{tpu_custom_call.1} parent=1 // pred_check_branch
      %46 = sbr.rel (%p44) target = $region21
    $region20: #{tpu_custom_call.1} parent=1 // pred_region
      %47 = vst [vmem:[#allocation2] sm:$0x3] 0.0
      %48 = vst [vmem:[#allocation3] sm:$0x3] 0.0
      %49 = vst [vmem:[#allocation4] sm:$0x3] 0.0
    $region21: #{tpu_custom_call.1} parent=1 // pred_fallthru
      _
    %v50 = vld [vmem:[#allocation5] sm:$0xff]
    %v51 = vld [vmem:[#allocation5 + $0x8] sm:$0xff]
    %v52 = vld [vmem:[#allocation8] sm:$0xff]
    %v53 = vld [vmem:[#allocation8 + $0x8] sm:$0xff]
    %v54 = vmax.f32 %v50, 0.0
    %v55 = vmax.f32 %v51, 0.0
    %v56 = vmul.f32 %v50, %v52
    %v57 = vmul.f32 %v51, %v53
    %v58 = vsub.f32 %v54, %v56
    %v59 = vsub.f32 %v55, %v57
    %v60 = vand.u32 2147483647, %v50
    %v61 = vand.u32 2147483647, %v51
    %v62 = vsub.f32 0.0, %v60
    %v63 = vsub.f32 0.0, %v61
    %v64 = vmul.f32 %v62, 1.442695
    %v65 = vpow.pop %v64
    %v66 = vmul.f32 %v63, 1.442695
    %v67 = vpow.pop %v66
    %v68 = vadd.f32 %v65, 1.0
    %v69 = vlog2.pop %v68
    %v70 = vmul.f32 %v69, 0.6931472
    %v71 = vmul.f32 -0.5, %v65
    %v72 = vadd.f32 %v71, 1.0
    %v73 = vmul.f32 %v72, %v65
    %v74 = vand.u32 2147483647, %v65
    %vm75 = vcmp.lt.f32.partialorder %v74, 0.0004427343
    %v76 = vsel %vm75, %v73, %v70
    %v77 = vadd.f32 %v67, 1.0
    %v78 = vlog2.pop %v77
    %v79 = vmul.f32 %v78, 0.6931472
    %v80 = vmul.f32 -0.5, %v67
    %v81 = vadd.f32 %v80, 1.0
    %v82 = vmul.f32 %v81, %v67
    %v83 = vand.u32 2147483647, %v67
    %vm84 = vcmp.lt.f32.partialorder %v83, 0.0004427343
    %v85 = vsel %vm84, %v82, %v79
    %v86 = vadd.f32 %v58, %v76
    %v87 = vadd.f32 %v59, %v85
    %v88 = vld [vmem:[#allocation2] sm:$0x3]
    %v89 = vrot.slane %v52, 4
    %v90 = vadd.f32 %v52, %v89
    %v91 = vrot.slane %v90, 2
    %v92 = vadd.f32 %v90, %v91
    %v93 = vrot.slane %v92, 1
    %v94 = vadd.f32 %v92, %v93
    %v95 = vrot.slane %v53, 4
    %v96 = vadd.f32 %v53, %v95
    %v97 = vrot.slane %v96, 2
    %v98 = vadd.f32 %v96, %v97
    %v99 = vrot.slane %v98, 1
    %v100 = vadd.f32 %v98, %v99
    %vm103 = vcmask 1041409
    %v104 = vsel %vm103, %v100, %v94
    %v106 = vadd.f32 %v88, %v104
    %107 = vst [vmem:[#allocation2] sm:$0x3] %v106
    %v108 = vld [vmem:[#allocation3] sm:$0x3]
    %v109 = vrot.slane %v86, 4
    %v110 = vadd.f32 %v86, %v109
    %v111 = vrot.slane %v110, 2
    %v112 = vadd.f32 %v110, %v111
    %v113 = vrot.slane %v112, 1
    %v114 = vadd.f32 %v112, %v113
    %v115 = vrot.slane %v87, 4
    %v116 = vadd.f32 %v87, %v115
    %v117 = vrot.slane %v116, 2
    %v118 = vadd.f32 %v116, %v117
    %v119 = vrot.slane %v118, 1
    %v120 = vadd.f32 %v118, %v119
    %v123 = vsel %vm103, %v120, %v114
    %v125 = vadd.f32 %v108, %v123
    %126 = vst [vmem:[#allocation3] sm:$0x3] %v125
    %v127 = vld [vmem:[#allocation4] sm:$0x3]
    %v128 = vmul.f32 %v86, %v52
    %v129 = vmul.f32 %v87, %v53
    %v130 = vrot.slane %v128, 4
    %v131 = vadd.f32 %v128, %v130
    %v132 = vrot.slane %v131, 2
    %v133 = vadd.f32 %v131, %v132
    %v134 = vrot.slane %v133, 1
    %v135 = vadd.f32 %v133, %v134
    %v136 = vrot.slane %v129, 4
    %v137 = vadd.f32 %v129, %v136
    %v138 = vrot.slane %v137, 2
    %v139 = vadd.f32 %v137, %v138
    %v140 = vrot.slane %v139, 1
    %v141 = vadd.f32 %v139, %v140
    %v144 = vsel %vm103, %v141, %v135
    %v146 = vadd.f32 %v127, %v144
    %147 = vst [vmem:[#allocation4] sm:$0x3] %v146
    // Predicated region
    $region22: #{tpu_custom_call.1} parent=1 // pred_check
      %p148 = pneg %p43
    $region23: #{tpu_custom_call.1} parent=1 // pred_check_branch
      %150 = sbr.rel (%p148) target = $region25
    $region24: #{tpu_custom_call.1} parent=1 // pred_region
      %v151 = vld [vmem:[#allocation2] sm:$0x3]
      %vm152 = vcmask 1041408
      %v153 = vsel %vm152, %v151, 0.0
      %154 = vadd.xlane.f32.xlu0 %v153
      %v155 = vpop.xlane.xlu0 %154
      %v156 = vmul.f32 %v155, 0.0009765625
      %v157 = vld [vmem:[#allocation3] sm:$0x3]
      %v158 = vld [vmem:[#allocation4] sm:$0x3]
      %v159 = vmul.f32 %v156, %v158
      %v160 = vadd.f32 %v157, %v159
      %161 = vst [vmem:[#allocation10] sm:$0x3] %v160
      %v162 = vmul.f32 %v156, %v151
      %v163 = vadd.f32 %v162, 8.0
      %164 = vst [vmem:[#allocation11] sm:$0x3] %v163
    $region25: #{tpu_custom_call.1} parent=1 // pred_fallthru
      _
    // Predicated region
    $region26: #{tpu_custom_call.1} parent=1 // pred_check
      _
    $region27: #{tpu_custom_call.1} parent=1 // pred_check_branch
      %166 = sbr.rel (0) target = $region29
    $region28: #{tpu_custom_call.1} parent=1 // pred_region
      %s168 = ssub.s32 32, 32
      %169 = vsyncadd [#allocation7], %s168
      %s171 = sshll.u32 [#allocation10], 4
      %s172 = int_to_ptr.vmem [resolvable:$true] %s171
      %174 = dma.vmem_to_hbm [thread:$0]  %s172, 32, %s2, [#allocation7]
    $region29: #{tpu_custom_call.1} parent=1 // pred_fallthru
      _
    // Predicated region
    $region30: #{tpu_custom_call.1} parent=1 // pred_check
      _
    $region31: #{tpu_custom_call.1} parent=1 // pred_check_branch
      %176 = sbr.rel (0) target = $region33
    $region32: #{tpu_custom_call.1} parent=1 // pred_region
      %s178 = ssub.s32 32, 32
      %179 = vsyncadd [#allocation12], %s178
      %s181 = sshll.u32 [#allocation11], 4
      %s182 = int_to_ptr.vmem [resolvable:$true] %s181
      %184 = dma.vmem_to_hbm [thread:$0]  %s182, 32, %s3, [#allocation12]
    $region33: #{tpu_custom_call.1} parent=1 // pred_fallthru
      _
    // Predicated region
    $region34: #{tpu_custom_call.1} parent=1 // pred_check
      _
    $region35: #{tpu_custom_call.1} parent=1 // pred_check_branch
      %186 = sbr.rel (0) target = $region37
    $region36: #{tpu_custom_call.1} parent=1 // pred_region
      %187 = dma.done [#allocation7], 32
    $region37: #{tpu_custom_call.1} parent=1 // pred_fallthru
      _
    // Predicated region
    $region38: #{tpu_custom_call.1} parent=1 // pred_check
      _
    $region39: #{tpu_custom_call.1} parent=1 // pred_check_branch
      %189 = sbr.rel (0) target = $region41
    $region40: #{tpu_custom_call.1} parent=1 // pred_region
      %190 = dma.done [#allocation12], 32
    $region41: #{tpu_custom_call.1} parent=1 // pred_fallthru
      _
    %191 = vsyncpa [#allocation6], 1
    %192 = vsyncpa [#allocation9], 1
    %193 = vsyncpa [#allocation7], 1
    %194 = vsyncpa [#allocation12], 1

</llo_original>
